<compile_context>
chip_gen: v6e
topology: v6e:2x2x1
jax: 0.10.0
libtpu: 0.0.40
codegen_flags: <defaults>
</compile_context>

<pallas_src>
import numpy as np
import jax
import jax.numpy as jnp
from jax.experimental import pallas as pl
from jax.experimental.pallas import tpu as pltpu

LRELU_SLOPE = 0.2
LRELU_GAIN = float(np.sqrt(2.0))   # bias_act def_gain for 'lrelu'


# --------------------------------------------------------------------------
# pltpu.roll sign convention: probe it once (outside any trace) instead of
# depending on the rotate sign convention of the backend.
# --------------------------------------------------------------------------
_ROLL_SIGN = None   # +1  <=>  pltpu.roll(x, s, ax)[i] == x[(i - s) % N]  (np.roll convention)


def _probe_roll_sign():
    def k(x_ref, o_ref):
        o_ref[...] = pltpu.roll(x_ref[...], 1, 1)
    x = jnp.tile(jnp.arange(128, dtype=jnp.float32)[None, :], (8, 1))
    y = pl.pallas_call(k, out_shape=jax.ShapeDtypeStruct((8, 128), jnp.float32))(x)
    return 1 if int(np.asarray(y)[0, 0]) == 127 else -1


def _roll_sign():
    global _ROLL_SIGN
    if _ROLL_SIGN is None:
        _ROLL_SIGN = _probe_roll_sign()
    return _ROLL_SIGN


# --------------------------------------------------------------------------
# In-kernel helpers (operate on values in the flat (C, B*H*W) layout)
# --------------------------------------------------------------------------
def _spatial_aux(C, N, H, W):
    """Per-lane spatial indices for the flat layout p = b*H*W + h*W + w."""
    lane = jax.lax.broadcasted_iota(jnp.int32, (C, N), 1)
    HW = H * W
    if (W & (W - 1)) == 0 and (HW & (HW - 1)) == 0:     # cheap bitwise path
        w_pos = lane & (W - 1)
        hw_pos = lane & (HW - 1)
    else:                                               # generic fallback
        w_pos = lane % W
        hw_pos = lane % HW
    return lane, w_pos, hw_pos


def _seg_mask(lane, b, HW):
    return (lane >= b * HW) & (lane < (b + 1) * HW)


def _shift_flat(x, dh, dw, aux, H, W):
    """y[c, b, h, w] = x[c, b, h+dh, w+dw], zero outside the HxW image."""
    lane, w_pos, hw_pos = aux
    C, N = x.shape
    HW = H * W
    d = dh * W + dw
    shift = (-d if _roll_sign() > 0 else d) % N
    rolled = pltpu.roll(x, shift, 1)
    ok = None
    if dw > 0:
        ok = w_pos < (W - dw)
    elif dw < 0:
        ok = w_pos >= (-dw)
    if dh > 0:
        okh = hw_pos < (HW - dh * W)
    elif dh < 0:
        okh = hw_pos >= (-dh) * W
    else:
        okh = None
    if okh is not None:
        ok = okh if ok is None else ok & okh
    return jnp.where(ok, rolled, 0.0) if ok is not None else rolled


def _instance_norm_flat(x, B, HW, lane, eps=1e-5):
    """InstanceNorm2d(affine=False): per-(c, b) normalization over the HW lanes."""
    inv = 1.0 / float(HW)
    mu = jnp.zeros_like(x)
    var = jnp.zeros_like(x)
    for b in range(B):
        m = _seg_mask(lane, b, HW)
        mf = m.astype(x.dtype)
        mean_b = jnp.sum(x * mf, axis=1, keepdims=True) * inv
        cent = (x - mean_b) * mf
        var_b = jnp.sum(cent * cent, axis=1, keepdims=True) * inv
        mu = jnp.where(m, mean_b, mu)
        var = jnp.where(m, var_b, var)
    return (x - mu) * jax.lax.rsqrt(var + eps)


def _expand_cb(vals_cb, B, HW, lane):
    """(C, B) per-(channel, batch) values -> (C, B*HW) broadcast over spatial lanes."""
    out = jnp.zeros(lane.shape, vals_cb.dtype)
    for b in range(B):
        out = jnp.where(_seg_mask(lane, b, HW), vals_cb[:, b:b + 1], out)
    return out


def _affine_cb(fc_w_ref, fc_b_ref, wT):
    """Prefolded FullyConnectedLayer, channel-major: (Cin, w_dim) @ (w_dim, B) + (Cin, 1)."""
    return jnp.dot(fc_w_ref[...], wT, preferred_element_type=jnp.float32) + fc_b_ref[...]


def _conv_fwd(conv, x, wT, B, H, W, *, norm, lrelu):
    """Fused Conv2d.forward: [instance-norm] -> [affine fma] -> [leaky-relu] -> conv(k) + bias.

    x: (Cin, B*H*W).  conv['w']: (k*k, Cout, Cin), prefolded with weight_gain*gain*act_gain.
    """
    HW = H * W
    C, N = x.shape
    ktaps = conv['w'].shape[0]
    k = int(round(float(np.sqrt(ktaps))))
    r = k // 2
    has_affine = conv['gw'] is not None

    aux = None
    if norm or has_affine or k > 1:
        aux = _spatial_aux(C, N, H, W)
    if norm:
        x = _instance_norm_flat(x, B, HW, aux[0])
    if has_affine:
        gamma = _affine_cb(conv['gw'], conv['gb'], wT)
        beta = _affine_cb(conv['bw'], conv['bb'], wT)
        x = x * _expand_cb(gamma, B, HW, aux[0]) + _expand_cb(beta, B, HW, aux[0])
    if lrelu:
        # def_gain sqrt(2) is folded into the conv weights
        x = jnp.where(x >= 0.0, x, LRELU_SLOPE * x)

    w = conv['w'][...]                      # (k*k, Cout, Cin)
    acc = None
    t = 0
    for dh in range(-r, r + 1):
        for dw in range(-r, r + 1):
            xs = x if (dh == 0 and dw == 0) else _shift_flat(x, dh, dw, aux, H, W)
            contrib = jnp.dot(w[t], xs, preferred_element_type=jnp.float32)
            acc = contrib if acc is None else acc + contrib
            t += 1
    if conv['b'] is not None:
        acc = acc + conv['b'][...]
    return acc


def _resblock_fwd(rb, x, wT, B, H, W):
    y = _conv_fwd(rb['skip'], x, wT, B, H, W, norm=False, lrelu=False)
    h = _conv_fwd(rb['conv0'], x, wT, B, H, W, norm=False, lrelu=True)
    h = _conv_fwd(rb['conv1'], h, wT, B, H, W, norm=False, lrelu=True)
    return y + h                              # residual add fused in-kernel


def _make_decoder_kernel(treedef, n_in, n_out, B, H0, W0):
    def kernel(*refs):
        tree = jax.tree_util.tree_unflatten(treedef, refs[:n_in])
        out_refs = refs[n_in:n_in + n_out]
        p = tree['params']
        x = tree['x'][...]                    # (C, B*H0*W0)
        wT = tree['wT'][...]                  # (w_dim, B)
        skip_feats = tree['skips']
        u_mats = tree['U']

        H, W = H0, W0
        for rb in p['middle']:
            x = _resblock_fwd(rb, x, wT, B, H, W)

        n_layers = len(p['layers'])
        si = 0
        for i, (skips, blocks) in enumerate(zip(p['unet'], p['layers'])):
            for skip_conv, rb in zip(skips, blocks):
                if skip_conv is not None:
                    # u-net skip: InstanceNorm -> lrelu -> 1x1 conv, then residual add
                    sx = skip_feats[si][...]
                    si += 1
                    sx = _conv_fwd(skip_conv, sx, wT, B, H, W, norm=True, lrelu=True)
                    x = x + sx
                x = _resblock_fwd(rb, x, wT, B, H, W)
            out_refs[1 + i][...] = x          # features[i]
            if i != n_layers - 1:
                # upfirdn2d(up=2) as a single lane-dense MXU matmul
                x = jnp.dot(x, u_mats[i][...], preferred_element_type=jnp.float32)
                H, W = 2 * H, 2 * W
        out_refs[0][...] = _conv_fwd(p['to_rgb'], x, wT, B, H, W, norm=False, lrelu=False)
    return kernel


# --------------------------------------------------------------------------
# Host-side layout helpers
# --------------------------------------------------------------------------
def _to_flat(x):                     # (B, C, H, W) -> (C, B*H*W)
    B, C, H, W = x.shape
    return x.transpose(1, 0, 2, 3).reshape(C, B * H * W)


def _from_flat(xf, B, H, W):         # (C, B*H*W) -> (B, C, H, W)
    C = xf.shape[0]
    return xf.reshape(C, B, H, W).transpose(1, 0, 2, 3)


def _up2_matrix(B, H, W):
    """upfirdn2d(up=2, filter=[1,3,3,1], gain=4) as a (B*H*W, B*2H*2W) matrix."""
    def axis_op(n):
        u = np.zeros((n, 2 * n), np.float32)
        for m in range(n):
            u[m, 2 * m] += 0.75              # even: 0.25*x[m-1] + 0.75*x[m]
            if m - 1 >= 0:
                u[m - 1, 2 * m] += 0.25
            u[m, 2 * m + 1] += 0.75          # odd:  0.75*x[m] + 0.25*x[m+1]
            if m + 1 < n:
                u[m + 1, 2 * m + 1] += 0.25
        return u
    uhw = np.kron(axis_op(H), axis_op(W))    # (H*W, 4*H*W)
    full = np.zeros((B * H * W, B * 4 * H * W), np.float32)
    for b in range(B):
        full[b * H * W:(b + 1) * H * W, b * 4 * H * W:(b + 1) * 4 * H * W] = uhw
    return jnp.asarray(full)


# --------------------------------------------------------------------------
# Parameter init (torch layout) and one-time prefolding into kernel layout
# --------------------------------------------------------------------------
def init_fc(key, in_f, out_f, bias_init):
    return {'weight': jax.random.normal(key, (out_f, in_f), jnp.float32),
            'bias': jnp.full((out_f,), float(bias_init), jnp.float32),
            'weight_gain': 1.0 / float(np.sqrt(in_f))}


def init_conv(key, in_c, out_c, k, *, bias=True, gain=1.0, activation='lrelu',
              norm=False, w_dim=None, bias_init=0.0):
    kw_, ka, kb = jax.random.split(key, 3)
    p = {'weight': jax.random.normal(kw_, (out_c, in_c, k, k), jnp.float32),
         'bias': jnp.full((out_c,), float(bias_init), jnp.float32) if bias else None,
         'weight_gain': 1.0 / float(np.sqrt(in_c * k * k)),
         'gain': float(gain), 'activation': activation, 'norm': bool(norm),
         'k': k, 'padding': k // 2}
    if w_dim is not None:
        p['affine'] = init_fc(ka, w_dim, in_c, 1.0)        # gamma, bias_init=1
        p['affine_beta'] = init_fc(kb, w_dim, in_c, 0.0)   # beta,  bias_init=0
    return p


def init_resblock(key, in_c, out_cs, skip_gain, w_dim):
    k0, k1, k2 = jax.random.split(key, 3)
    return {'conv0': init_conv(k0, in_c, out_cs[0], 3, bias=True, gain=1.0,
                               activation='lrelu', norm=False, w_dim=w_dim),
            'conv1': init_conv(k1, out_cs[0], out_cs[1], 3, bias=True, gain=skip_gain,
                               activation='lrelu', norm=False, w_dim=w_dim),
            'skip': init_conv(k2, in_c, out_cs[1], 1, bias=False, gain=skip_gain,
                              activation='linear', norm=False)}


def init_decoder(key, dim, dim_mults, num_resnet_blocks, n_middle_blocks, w_dim, im_channels):
    dims = [dim * m for m in dim_mults]
    n_layers = len(dims)
    params = {'middle': [], 'layers': [], 'unet': []}
    for _ in range(n_middle_blocks):
        key, k = jax.random.split(key)
        params['middle'].append(
            init_resblock(k, dims[-1], [dims[-1], dims[-1]], float(np.sqrt(0.5)), w_dim))
    dim_out = dims[-1]
    for lidx in range(n_layers):
        dim_in = dims[min(-lidx, -1)]
        dim_out = dims[-1 - lidx]
        blocks, skips = [], []
        for i in range(num_resnet_blocks[-lidx - 1]):
            is_first = i == 0
            has_unet = is_first and lidx != 0
            cur_dim = dim_in if is_first else dim_out
            n = 2 + int(has_unet)
            gain = float(np.sqrt(1.0 / n))
            key, k = jax.random.split(key)
            blocks.append(init_resblock(k, cur_dim, [cur_dim, dim_out], gain, w_dim))
            if has_unet:
                key, k = jax.random.split(key)
                skips.append(init_conv(k, cur_dim, cur_dim, 1, bias=False, gain=gain,
                                       activation='lrelu', norm=True))
            else:
                skips.append(None)             # torch.nn.Identity
        params['layers'].append(blocks)
        params['unet'].append(skips)
    key, k = jax.random.split(key)
    params['to_rgb'] = init_conv(k, dim_out, im_channels, 1, bias=True, gain=1.0,
                                 activation='linear', norm=False)
    return params


def _prep_conv(c):
    """Fold weight_gain*gain*(lrelu def_gain) into the weights, tap-major layout."""
    k = c['k']
    out_c, in_c = c['weight'].shape[0], c['weight'].shape[1]
    act_lrelu = c['activation'] == 'lrelu'
    scale = c['weight_gain'] * c['gain'] * (LRELU_GAIN if act_lrelu else 1.0)
    w = (c['weight'] * scale).transpose(2, 3, 0, 1).reshape(k * k, out_c, in_c)
    p = {'w': jnp.asarray(w, jnp.float32),
         'b': None if c['bias'] is None
              else jnp.asarray(c['bias'] * c['gain'], jnp.float32).reshape(out_c, 1),
         'gw': None, 'gb': None, 'bw': None, 'bb': None}
    if 'affine' in c:
        a, ab = c['affine'], c['affine_beta']
        p['gw'] = jnp.asarray(a['weight'] * a['weight_gain'], jnp.float32)
        p['gb'] = jnp.asarray(a['bias'], jnp.float32).reshape(in_c, 1)
        p['bw'] = jnp.asarray(ab['weight'] * ab['weight_gain'], jnp.float32)
        p['bb'] = jnp.asarray(ab['bias'], jnp.float32).reshape(in_c, 1)
    return p


def _prep_resblock(rb):
    return {'conv0': _prep_conv(rb['conv0']),
            'conv1': _prep_conv(rb['conv1']),
            'skip': _prep_conv(rb['skip'])}


def prepare_decoder_params(raw):
    return {'middle': [_prep_resblock(rb) for rb in raw['middle']],
            'layers': [[_prep_resblock(rb) for rb in blocks] for blocks in raw['layers']],
            'unet': [[(None if c is None else _prep_conv(c)) for c in skips]
                     for skips in raw['unet']],
            'to_rgb': _prep_conv(raw['to_rgb'])}


# --------------------------------------------------------------------------
# Fused forward (single pallas_call)
# --------------------------------------------------------------------------
def decoder_forward(prep, x, w_latent, unet_features, s=None):
    assert s is None   # TODO(synk): `s` style-iterator path not implemented
    _roll_sign()       # resolve pltpu.roll convention before any tracing
    B, _, H0, W0 = x.shape
    params = prep
    n_layers = len(params['layers'])

    # Static architecture walk: collect used u-net skip features, upsample
    # operators and per-layer feature output shapes.
    uf_rev = list(reversed(unet_features))
    used_skips, u_list, feat_specs = [], [], []
    idx = 0
    H, W = H0, W0
    for i, (skips, blocks) in enumerate(zip(params['unet'], params['layers'])):
        for skip_conv, _blk in zip(skips, blocks):
            sf = uf_rev[idx]
            idx += 1
            if skip_conv is not None:
                used_skips.append(_to_flat(sf))
        c_out = blocks[-1]['conv1']['w'].shape[1]
        feat_specs.append((c_out, H, W))
        if i != n_layers - 1:
            u_list.append(_up2_matrix(B, H, W))
            H, W = 2 * H, 2 * W
    rgb_c = params['to_rgb']['w'].shape[1]

    inputs_tree = {'x': _to_flat(x),
                   'wT': w_latent.T,      # (w_dim, B): gamma/beta computed channel-major
                   'skips': used_skips,
                   'U': u_list,
                   'params': params}
    flat_in, treedef = jax.tree_util.tree_flatten(inputs_tree)

    out_shape = tuple(
        [jax.ShapeDtypeStruct((rgb_c, B * H * W), jnp.float32)]
        + [jax.ShapeDtypeStruct((c, B * h * w), jnp.float32) for (c, h, w) in feat_specs])

    in_elems = sum(int(np.prod(l.shape)) for l in flat_in)
    out_elems = sum(int(np.prod(o.shape)) for o in out_shape)
    cost = pl.CostEstimate(flops=int(2 * in_elems * B * H * W),      # rough upper bound
                           transcendentals=0,
                           bytes_accessed=int(4 * (in_elems + out_elems)))

    kernel = _make_decoder_kernel(treedef, len(flat_in), len(out_shape), B, H0, W0)
    outs = pl.pallas_call(kernel, out_shape=out_shape, cost_estimate=cost)(*flat_in)

    rgb = _from_flat(outs[0], B, H, W)
    features = [_from_flat(o, B, h, w) for o, (c, h, w) in zip(outs[1:], feat_specs)]
    return rgb, features


# --------------------------------------------------------------------------
# Pure-JAX reference (mirrors the PyTorch module, uses the unfolded params)
# --------------------------------------------------------------------------
def _fc_ref(p, x):
    return jnp.dot(x, (p['weight'] * p['weight_gain']).T,
                   precision=jax.lax.Precision.HIGHEST) + p['bias']


def _conv_ref(p, x, w_latent=None):
    B, C, H, W = x.shape
    if p['norm']:
        mu = x.mean(axis=(2, 3), keepdims=True)
        var = ((x - mu) ** 2).mean(axis=(2, 3), keepdims=True)
        x = (x - mu) * jax.lax.rsqrt(var + 1e-5)
    if 'affine' in p:
        gamma = _fc_ref(p['affine'], w_latent).reshape(B, C, 1, 1)
        beta = _fc_ref(p['affine_beta'], w_latent).reshape(B, C, 1, 1)
        x = x * gamma + beta
    if p['activation'] == 'lrelu':
        x = jnp.where(x >= 0, x, LRELU_SLOPE * x) * LRELU_GAIN
    w = p['weight'] * (p['weight_gain'] * p['gain'])
    pad = p['padding']
    y = jax.lax.conv_general_dilated(x, w, window_strides=(1, 1),
                                     padding=[(pad, pad), (pad, pad)],
                                     dimension_numbers=('NCHW', 'OIHW', 'NCHW'),
                                     precision=jax.lax.Precision.HIGHEST)
    if p['bias'] is not None:
        y = y + (p['bias'] * p['gain']).reshape(1, -1, 1, 1)
    return y


def _resblock_ref(p, x, w_latent):
    y = _conv_ref(p['skip'], x)
    h = _conv_ref(p['conv0'], x, w_latent)
    h = _conv_ref(p['conv1'], h, w_latent)
    return y + h


def _upfirdn2d_up2_ref(x):
    B, C, H, W = x.shape
    zH = jnp.zeros((B, C, 1, W), x.dtype)
    xm = jnp.concatenate([zH, x[:, :, :-1, :]], axis=2)
    xp = jnp.concatenate([x[:, :, 1:, :], zH], axis=2)
    y = jnp.stack([0.25 * xm + 0.75 * x, 0.75 * x + 0.25 * xp], axis=3).reshape(B, C, 2 * H, W)
    zW = jnp.zeros((B, C, 2 * H, 1), x.dtype)
    ym = jnp.concatenate([zW, y[:, :, :, :-1]], axis=3)
    yp = jnp.concatenate([y[:, :, :, 1:], zW], axis=3)
    return jnp.stack([0.25 * ym + 0.75 * y, 0.75 * y + 0.25 * yp], axis=4).reshape(B, C, 2 * H, 2 * W)


def decoder_forward_ref(raw, x, w_latent, unet_features):
    for rb in raw['middle']:
        x = _resblock_ref(rb, x, w_latent)
    features = []
    uf = list(reversed(unet_features))
    idx = 0
    n_layers = len(raw['layers'])
    for i, (skips, blocks) in enumerate(zip(raw['unet'], raw['layers'])):
        for sk, blk in zip(skips, blocks):
            sx = uf[idx]
            idx += 1
            if sk is not None:
                sx = _conv_ref(sk, sx)
                x = x + sx
            x = _resblock_ref(blk, x, w_latent)
        features.append(x)
        if i != n_layers - 1:
            x = _upfirdn2d_up2_ref(x)
    x = _conv_ref(raw['to_rgb'], x)
    return x, features


# --------------------------------------------------------------------------
if __name__ == "__main__":
    key = jax.random.PRNGKey(0)
    # Decoder config: dim=4, dim_mults=(1,2) -> dims=[4,8], 2 u-net levels,
    # 1 resnet block per level, 1 middle block, w_dim=8, im_channels=3, imsize=(16,16).
    dim, dim_mults = 4, (1, 2)
    num_resnet_blocks = (1, 1)
    n_middle_blocks = 1
    w_dim, im_channels = 8, 3
    imsize = (16, 16)
    B = 2

    dims = [dim * m for m in dim_mults]
    n_layers = len(dims)

    _roll_sign()   # one-time probe, eagerly (outside any trace)

    kp, kx, kw, ku0, ku1 = jax.random.split(key, 5)
    raw = init_decoder(kp, dim, dim_mults, num_resnet_blocks, n_middle_blocks,
                       w_dim, im_channels)
    prep = prepare_decoder_params(raw)     # fold scales once, not per forward

    H0 = imsize[0] // 2 ** (n_layers - 1)
    W0 = imsize[1] // 2 ** (n_layers - 1)
    x = jax.random.normal(kx, (B, dims[-1], H0, W0), jnp.float32)        # (2, 8, 8, 8)
    w_latent = jax.random.normal(kw, (B, w_dim), jnp.float32)            # (2, 8)
    unet_features = [
        jax.random.normal(ku1, (B, dims[-1], imsize[0], imsize[1]), jnp.float32),  # lidx=1
        jax.random.normal(ku0, (B, dims[-1], H0, W0), jnp.float32),                # lidx=0 (Identity)
    ]

    out, features = decoder_forward(prep, x, w_latent, unet_features, s=None)
    out = jax.block_until_ready(out)
    features = jax.block_until_ready(features)

    assert out.shape == (B, im_channels, imsize[0], imsize[1]), out.shape
    assert features[0].shape == (B, dims[-1], H0, W0)
    assert features[1].shape == (B, dims[0], imsize[0], imsize[1])
    assert bool(jnp.all(jnp.isfinite(out)))

    # correctness check vs. a pure-JAX reference of the PyTorch forward
    out_ref, feats_ref = decoder_forward_ref(raw, x, w_latent, unet_features)

    def _err(a, b):
        a = np.asarray(a)
        b = np.asarray(b)
        return float(np.max(np.abs(a - b)) / (np.max(np.abs(b)) + 1e-6))

    assert _err(out, out_ref) < 2e-2, f"rgb mismatch: {_err(out, out_ref)}"
    for f, fr in zip(features, feats_ref):
        assert _err(f, fr) < 2e-2, f"feature mismatch: {_err(f, fr)}"

    print("KERNEL_OK")
</pallas_src>

<mosaic_0001>
module attributes {stable_mosaic.version = 11 : i64} {
  func.func @k(%arg0: memref<8x128xf32, #tpu.memory_space<vmem>>, %arg1: memref<8x128xf32, #tpu.memory_space<vmem>>) attributes {dimension_semantics = [], scalar_prefetch = 0 : i64, scratch_operands = 0 : i64, tpu.core_type = #tpu.core_type<tc>} {
    %c0 = arith.constant 0 : index
    %c0_0 = arith.constant 0 : index
    %0 = vector.load %arg0[%c0, %c0_0] : memref<8x128xf32, #tpu.memory_space<vmem>>, vector<8x128xf32>
    %c1_i32 = arith.constant 1 : i32
    %1 = tpu.dynamic_rotate %0 by %c1_i32 dim 1 : vector<8x128xf32>, i32 -> vector<8x128xf32>
    %c0_1 = arith.constant 0 : index
    %c0_2 = arith.constant 0 : index
    %2 = vector.load %arg1[%c0_1, %c0_2] : memref<8x128xf32, #tpu.memory_space<vmem>>, vector<8x128xf32>
    tpu.vector_store %arg1[%c0_1, %c0_2], %1 {strides = array<i32>} : memref<8x128xf32, #tpu.memory_space<vmem>>, vector<8x128xf32>,
    return
  }
}

</mosaic_0001>

<llo_original>
// kernel: tpu_custom_call.1
$region0: #{tpu_custom_call.1}
  #allocation0 [shape = 'u32[]', space=smem, size = 0x4, offset = 0x4, fixed_abs, tag = 'smem constant byte address 0x4 - core index']
  #allocation1 [shape = 'u32[144,128]{1,0:T(1,128)}', space=vmem, size = 0x12000, scoped, tag = 'internal scratch']
  %s0 = inlined_call_operand.hbm [shape: f32[8,128], index: 0, kind: input, shape index: {}]
  %s1 = inlined_call_operand.hbm [shape: f32[8,128], index: 1, kind: output, shape index: {}]
  %s2 = sld [smem:[#allocation0]]
  $region18: #{tpu_custom_call.1} parent=0
    _
  %s4 = ssub.s32 1, %s2
  %s5 = scalar_select 0, %s4, %s2
  $region1: #{tpu_custom_call.1} parent=0
    #allocation2 [shape = 'u8[4096]{0}', space=vmem, size = 0x1000, scoped, tag = 'input window, operand 0, single buffered']
    #allocation3 [shape = 's32[1]{0}', space=sflag, size = 0x4, scoped, tag = 'scoped memory for tpu_custom_call.1']
    #allocation4 [shape = 's32[1]{0}', space=sflag, size = 0x4, scoped, tag = 'scoped memory for tpu_custom_call.1']
    #allocation5 [shape = 'u8[4096]{0}', space=vmem, size = 0x1000, scoped, tag = 'output window, operand 0, single buffered']
    %6 = vsyncpa [#allocation3], 0
    %7 = vsyncpa [#allocation4], 0
    // Predicated region
    $region2: #{tpu_custom_call.1} parent=1 // pred_check
      _
    $region3: #{tpu_custom_call.1} parent=1 // pred_check_branch
      %9 = sbr.rel (0) target = $region5
    $region4: #{tpu_custom_call.1} parent=1 // pred_region
      %s11 = ssub.s32 128, 128
      %12 = vsyncadd [#allocation3], %s11
      %s14 = sshll.u32 [#allocation2], 4
      %s15 = int_to_ptr.vmem [resolvable:$true] %s14
      %17 = dma.hbm_to_vmem [thread:$0]  %s0, 128, %s15, [#allocation3]
    $region5: #{tpu_custom_call.1} parent=1 // pred_fallthru
      _
    // Predicated region
    $region6: #{tpu_custom_call.1} parent=1 // pred_check
      _
    $region7: #{tpu_custom_call.1} parent=1 // pred_check_branch
      %19 = sbr.rel (0) target = $region9
    $region8: #{tpu_custom_call.1} parent=1 // pred_region
      %20 = dma.done [#allocation3], 128
    $region9: #{tpu_custom_call.1} parent=1 // pred_fallthru
      _
    %v21 = vld [vmem:[#allocation2] sm:$0xff]
    %22 = vrot.lane.b32.xlu0 %v21, 1
    %v23 = vpop.permute.xlu0 %22
    %24 = vst [vmem:[#allocation5] sm:$0xff] %v23
    // Predicated region
    $region10: #{tpu_custom_call.1} parent=1 // pred_check
      _
    $region11: #{tpu_custom_call.1} parent=1 // pred_check_branch
      %26 = sbr.rel (0) target = $region13
    $region12: #{tpu_custom_call.1} parent=1 // pred_region
      %s28 = ssub.s32 128, 128
      %29 = vsyncadd [#allocation4], %s28
      %s31 = sshll.u32 [#allocation5], 4
      %s32 = int_to_ptr.vmem [resolvable:$true] %s31
      %34 = dma.vmem_to_hbm [thread:$0]  %s32, 128, %s1, [#allocation4]
    $region13: #{tpu_custom_call.1} parent=1 // pred_fallthru
      _
    // Predicated region
    $region14: #{tpu_custom_call.1} parent=1 // pred_check
      _
    $region15: #{tpu_custom_call.1} parent=1 // pred_check_branch
      %36 = sbr.rel (0) target = $region17
    $region16: #{tpu_custom_call.1} parent=1 // pred_region
      %37 = dma.done [#allocation4], 128
    $region17: #{tpu_custom_call.1} parent=1 // pred_fallthru
      _
    %38 = vsyncpa [#allocation3], 1
    %39 = vsyncpa [#allocation4], 1

</llo_original>
